<compile_context>
chip_gen: v5e
topology: v5e:2x2
jax: 0.10.0
libtpu: 0.0.40
codegen_flags: <defaults>
</compile_context>

<pallas_src>
import functools

import jax
import jax.numpy as jnp
from jax import lax
from jax.experimental import pallas as pl
from jax.experimental.pallas import tpu as pltpu


# ----------------------------------------------------------------------------
# Kernel
# ----------------------------------------------------------------------------
def _make_gru_kernel(num_layers: int, hidden_dim: int):
    L, H = num_layers, hidden_dim

    def kernel(x_ref, len_ref, *rest):
        # rest = [wih_0, whh_0, bi_0, bhn_0, ..., wfc, bfc, out_ref, h_scratch]
        w_refs = rest[: 4 * L]
        wfc_ref, bfc_ref, out_ref, h_scr = rest[4 * L:]

        c = pl.program_id(0)

        @pl.when(c == 0)
        def _():
            h_scr[...] = jnp.zeros_like(h_scr)

        Tc = x_ref.shape[0]                       # timesteps in this chunk
        t0 = c * Tc                               # global start timestep
        lengths = len_ref[...]                    # (B, 1) int32, loaded once

        # Hidden state carried in registers within the chunk.
        h_init = tuple(h_scr[l] for l in range(L))

        def step(i, h):
            t = t0 + i
            # pack_padded_sequence semantics: freeze rows with t >= lengths[b].
            m = (t < lengths).astype(jnp.float32)          # (B, 1)
            xl = x_ref[i]                                  # (B, D_in) f32
            new_h = []
            for l in range(L):
                wih = w_refs[4 * l + 0][...]               # (D_l, 3H) bf16
                whh = w_refs[4 * l + 1][...]               # (H,   3H) bf16
                bi = w_refs[4 * l + 2][...]                # (1,   3H) f32
                bhn = w_refs[4 * l + 3][...]               # (1,    H) f32
                hp = h[l]                                  # (B, H) f32

                # Fused 3-gate matmuls; f32 accumulation on the MXU.
                gi = jnp.dot(xl.astype(jnp.bfloat16), wih,
                             preferred_element_type=jnp.float32) + bi
                gh = jnp.dot(hp.astype(jnp.bfloat16), whh,
                             preferred_element_type=jnp.float32)

                r = jax.nn.sigmoid(gi[:, 0:H] + gh[:, 0:H])
                z = jax.nn.sigmoid(gi[:, H:2 * H] + gh[:, H:2 * H])
                n = jnp.tanh(gi[:, 2 * H:3 * H] + r * (gh[:, 2 * H:3 * H] + bhn))
                hn = (1.0 - z) * n + z * hp

                hu = m * hn + (1.0 - m) * hp
                new_h.append(hu)
                xl = hu
            return tuple(new_h)

        h_fin = lax.fori_loop(0, Tc, step, h_init)

        # Persist hidden state for the next chunk.
        for l in range(L):
            h_scr[l] = h_fin[l]

        # Final Linear layer on hidden[-1] (last layer, last valid step).
        @pl.when(c == pl.num_programs(0) - 1)
        def _():
            out_ref[...] = (
                jnp.dot(h_fin[L - 1].astype(jnp.bfloat16), wfc_ref[...],
                        preferred_element_type=jnp.float32)
                + bfc_ref[...]
            )

    return kernel


# ----------------------------------------------------------------------------
# Wrapper
# ----------------------------------------------------------------------------
def gru_model_forward(x, lengths, params, time_chunk=64):
    """x: (B, T, D) float32 (batch_first, as in PyTorch), lengths: (B,) int."""
    B, T, D = x.shape
    H = params["hidden_dim"]
    L = params["num_layers"]
    C = params["num_classes"]

    # Pad batch to a multiple of 8 sublanes; pad time to a multiple of Tc.
    B_pad = max(8, ((B + 7) // 8) * 8)
    Tc = min(time_chunk, T)
    n_chunks = (T + Tc - 1) // Tc
    T_pad = n_chunks * Tc

    x_tm = jnp.transpose(x, (1, 0, 2)).astype(jnp.float32)        # (T, B, D)
    x_tm = jnp.pad(x_tm, ((0, T_pad - T), (0, B_pad - B), (0, 0)))
    len_col = jnp.pad(lengths.astype(jnp.int32), (0, B_pad - B))[:, None]  # (B_pad, 1)

    vmem_resident = pl.BlockSpec(memory_space=pltpu.MemorySpace.VMEM)

    inputs = [x_tm, len_col]
    in_specs = [
        pl.BlockSpec((Tc, B_pad, D), lambda c: (c, 0, 0)),   # pipelined over chunks
        vmem_resident,                                       # lengths, loaded once
    ]
    for (wih, whh, bi, bhn) in params["layers"]:
        inputs += [wih, whh, bi, bhn]
        in_specs += [vmem_resident] * 4
    wfc, bfc = params["fc"]
    inputs += [wfc, bfc]
    in_specs += [vmem_resident] * 2

    kernel = _make_gru_kernel(L, H)

    out = pl.pallas_call(
        kernel,
        out_shape=jax.ShapeDtypeStruct((B_pad, C), jnp.float32),
        grid_spec=pltpu.PrefetchScalarGridSpec(
            num_scalar_prefetch=0,
            grid=(n_chunks,),
            in_specs=in_specs,
            out_specs=pl.BlockSpec((B_pad, C), lambda c: (0, 0)),
            scratch_shapes=[pltpu.VMEM((L, B_pad, H), jnp.float32)],
        ),
        compiler_params=pltpu.CompilerParams(
            dimension_semantics=("arbitrary",),   # recurrence -> sequential grid
        ),
    )(*inputs)
    return out[:B]


# ----------------------------------------------------------------------------
# Deterministic parameter init (PyTorch-style U(-1/sqrt(H), 1/sqrt(H)))
# Weights are pre-packed/fused for the kernel:
#   wih: (D_l, 3H) bf16   [r | z | n] columns
#   whh: (H,   3H) bf16
#   bi : (1,   3H) f32    [bih_r+bhh_r | bih_z+bhh_z | bih_n]
#   bhn: (1,    H) f32    bhh_n (must stay separate: n = tanh(gi_n + r*(gh_n+bhh_n)))
# ----------------------------------------------------------------------------
def init_params(key, input_dim, hidden_dim, num_layers, num_classes):
    k = 1.0 / float(jnp.sqrt(jnp.float32(hidden_dim)))
    params = {
        "hidden_dim": hidden_dim,
        "num_layers": num_layers,
        "num_classes": num_classes,
        "layers": [],
    }
    for layer in range(num_layers):
        d_in = input_dim if layer == 0 else hidden_dim
        key, k1, k2, k3, k4 = jax.random.split(key, 5)
        wih = jax.random.uniform(k1, (3, d_in, hidden_dim), jnp.float32, -k, k)
        whh = jax.random.uniform(k2, (3, hidden_dim, hidden_dim), jnp.float32, -k, k)
        bih = jax.random.uniform(k3, (3, hidden_dim), jnp.float32, -k, k)
        bhh = jax.random.uniform(k4, (3, hidden_dim), jnp.float32, -k, k)

        wih_p = jnp.concatenate([wih[0], wih[1], wih[2]], axis=1).astype(jnp.bfloat16)
        whh_p = jnp.concatenate([whh[0], whh[1], whh[2]], axis=1).astype(jnp.bfloat16)
        bi = jnp.concatenate([bih[0] + bhh[0], bih[1] + bhh[1], bih[2]], axis=0)[None, :]
        bhn = bhh[2][None, :]
        params["layers"].append((wih_p, whh_p, bi, bhn))

    key, k5, k6 = jax.random.split(key, 3)
    wfc = jax.random.uniform(k5, (hidden_dim, num_classes), jnp.float32, -k, k)
    bfc = jax.random.uniform(k6, (1, num_classes), jnp.float32, -k, k)
    params["fc"] = (wfc.astype(jnp.bfloat16), bfc)
    return params


# ----------------------------------------------------------------------------
# Pure-JAX reference (identical math / identical bf16 casts) for correctness
# ----------------------------------------------------------------------------
def gru_model_reference(x, lengths, params):
    B, T, D = x.shape
    H = params["hidden_dim"]
    L = params["num_layers"]
    h = [jnp.zeros((B, H), jnp.float32) for _ in range(L)]
    for t in range(T):
        inp = x[:, t, :].astype(jnp.float32)
        m = (t < lengths).astype(jnp.float32)[:, None]
        xl = inp
        for l in range(L):
            wih, whh, bi, bhn = params["layers"][l]
            hp = h[l]
            gi = jnp.dot(xl.astype(jnp.bfloat16), wih,
                         preferred_element_type=jnp.float32) + bi
            gh = jnp.dot(hp.astype(jnp.bfloat16), whh,
                         preferred_element_type=jnp.float32)
            r = jax.nn.sigmoid(gi[:, 0:H] + gh[:, 0:H])
            z = jax.nn.sigmoid(gi[:, H:2 * H] + gh[:, H:2 * H])
            n = jnp.tanh(gi[:, 2 * H:3 * H] + r * (gh[:, 2 * H:3 * H] + bhn))
            hn = (1.0 - z) * n + z * hp
            h[l] = m * hn + (1.0 - m) * hp
            xl = h[l]
    wfc, bfc = params["fc"]
    return jnp.dot(h[-1].astype(jnp.bfloat16), wfc,
                   preferred_element_type=jnp.float32) + bfc


# ----------------------------------------------------------------------------
if __name__ == "__main__":
    INPUT_DIM, HIDDEN_DIM, NUM_LAYERS, NUM_CLASSES = 16, 32, 2, 8
    B, T = 4, 8

    key = jax.random.PRNGKey(0)
    key, kx = jax.random.split(key)
    x = jax.random.normal(kx, (B, T, INPUT_DIM), jnp.float32)
    lengths = jnp.array([8, 5, 3, 6], jnp.int32)

    params = init_params(key, INPUT_DIM, HIDDEN_DIM, NUM_LAYERS, NUM_CLASSES)

    out = gru_model_forward(x, lengths, params)
    out = jax.block_until_ready(out)

    ref = gru_model_reference(x, lengths, params)
    assert out.shape == (B, NUM_CLASSES)
    assert jnp.allclose(out, ref, atol=1e-3, rtol=1e-3), "mismatch vs reference"

    print("KERNEL_OK")
</pallas_src>

<mosaic_0001>
module attributes {stable_mosaic.version = 11 : i64} {
  func.func @kernel(%arg0: i32, %arg1: memref<8x8x16xf32, #tpu.memory_space<vmem>>, %arg2: memref<8x1xi32, #tpu.memory_space<vmem>>, %arg3: memref<16x96xbf16, #tpu.memory_space<vmem>>, %arg4: memref<32x96xbf16, #tpu.memory_space<vmem>>, %arg5: memref<1x96xf32, #tpu.memory_space<vmem>>, %arg6: memref<1x32xf32, #tpu.memory_space<vmem>>, %arg7: memref<32x96xbf16, #tpu.memory_space<vmem>>, %arg8: memref<32x96xbf16, #tpu.memory_space<vmem>>, %arg9: memref<1x96xf32, #tpu.memory_space<vmem>>, %arg10: memref<1x32xf32, #tpu.memory_space<vmem>>, %arg11: memref<32x8xbf16, #tpu.memory_space<vmem>>, %arg12: memref<1x8xf32, #tpu.memory_space<vmem>>, %arg13: memref<8x8xf32, #tpu.memory_space<vmem>>, %arg14: memref<2x8x32xf32, #tpu.memory_space<vmem>>) attributes {dimension_semantics = [#tpu.dimension_semantics<arbitrary>], iteration_bounds = array<i64: 1>, scalar_prefetch = 0 : i64, scratch_operands = 1 : i64, tpu.core_type = #tpu.core_type<tc>, window_params = [{transform_indices = @transform_0, window_bounds = array<i64: 8, 8, 16>}, {pipeline_mode = #tpu.pipeline_mode<synchronous>, transform_indices = @transform_1, window_bounds = array<i64: 8, 1>}, {pipeline_mode = #tpu.pipeline_mode<synchronous>, transform_indices = @transform_2, window_bounds = array<i64: 16, 96>}, {pipeline_mode = #tpu.pipeline_mode<synchronous>, transform_indices = @transform_3, window_bounds = array<i64: 32, 96>}, {pipeline_mode = #tpu.pipeline_mode<synchronous>, transform_indices = @transform_4, window_bounds = array<i64: 1, 96>}, {pipeline_mode = #tpu.pipeline_mode<synchronous>, transform_indices = @transform_5, window_bounds = array<i64: 1, 32>}, {pipeline_mode = #tpu.pipeline_mode<synchronous>, transform_indices = @transform_6, window_bounds = array<i64: 32, 96>}, {pipeline_mode = #tpu.pipeline_mode<synchronous>, transform_indices = @transform_7, window_bounds = array<i64: 32, 96>}, {pipeline_mode = #tpu.pipeline_mode<synchronous>, transform_indices = @transform_8, window_bounds = array<i64: 1, 96>}, {pipeline_mode = #tpu.pipeline_mode<synchronous>, transform_indices = @transform_9, window_bounds = array<i64: 1, 32>}, {pipeline_mode = #tpu.pipeline_mode<synchronous>, transform_indices = @transform_10, window_bounds = array<i64: 32, 8>}, {pipeline_mode = #tpu.pipeline_mode<synchronous>, transform_indices = @transform_11, window_bounds = array<i64: 1, 8>}, {pipeline_mode = #tpu.pipeline_mode<synchronous>, transform_indices = @transform_12, window_bounds = array<i64: 8, 8>}]} {
    %c0_i32 = arith.constant 0 : i32
    %0 = arith.cmpi eq, %arg0, %c0_i32 : i32
    %1 = arith.extui %0 : i1 to i32
    %c0_i32_0 = arith.constant 0 : i32
    %2 = arith.cmpi ne, %1, %c0_i32_0 : i32
    scf.if %2 {
      %cst = arith.constant 0.000000e+00 : f32
      %20 = vector.broadcast %cst : f32 to vector<2x8x32xf32>
      %c0_18 = arith.constant 0 : index
      %c0_19 = arith.constant 0 : index
      %c0_20 = arith.constant 0 : index
      %21 = vector.load %arg14[%c0_18, %c0_19, %c0_20] : memref<2x8x32xf32, #tpu.memory_space<vmem>>, vector<2x8x32xf32>
      tpu.vector_store %arg14[%c0_18, %c0_19, %c0_20], %20 {strides = array<i32>} : memref<2x8x32xf32, #tpu.memory_space<vmem>>, vector<2x8x32xf32>,
    } else {
    }
    %c8_i32 = arith.constant 8 : i32
    %3 = arith.muli %arg0, %c8_i32 : i32
    %c0 = arith.constant 0 : index
    %c0_1 = arith.constant 0 : index
    %4 = vector.load %arg2[%c0, %c0_1] : memref<8x1xi32, #tpu.memory_space<vmem>>, vector<8x1xi32>
    %c0_2 = arith.constant 0 : index
    %c0_3 = arith.constant 0 : index
    %c0_4 = arith.constant 0 : index
    %5 = vector.load %arg14[%c0_2, %c0_3, %c0_4] : memref<2x8x32xf32, #tpu.memory_space<vmem>>, vector<1x8x32xf32>
    %6 = vector.shape_cast %5 : vector<1x8x32xf32> to vector<8x32xf32>
    %c1 = arith.constant 1 : index
    %c0_5 = arith.constant 0 : index
    %c0_6 = arith.constant 0 : index
    %7 = vector.load %arg14[%c1, %c0_5, %c0_6] : memref<2x8x32xf32, #tpu.memory_space<vmem>>, vector<1x8x32xf32>
    %8 = vector.shape_cast %7 : vector<1x8x32xf32> to vector<8x32xf32>
    %c0_i32_7 = arith.constant 0 : i32
    %c8_i32_8 = arith.constant 8 : i32
    %9 = arith.addi %c0_i32_7, %c8_i32_8 : i32
    %c1_i32 = arith.constant 1 : i32
    %10:2 = scf.for %arg15 = %c0_i32_7 to %9 step %c1_i32 iter_args(%arg16 = %6, %arg17 = %8) -> (vector<8x32xf32>, vector<8x32xf32>)  : i32 {
      %20 = arith.addi %3, %arg15 : i32
      %21 = vector.broadcast %20 : i32 to vector<8x1xi32>
      %22 = arith.cmpi slt, %21, %4 : vector<8x1xi32>
      %23 = arith.extui %22 : vector<8x1xi1> to vector<8x1xi32>
      %24 = arith.sitofp %23 : vector<8x1xi32> to vector<8x1xf32>
      %25 = arith.index_cast %arg15 : i32 to index
      %c0_18 = arith.constant 0 : index
      %c0_19 = arith.constant 0 : index
      %26 = vector.load %arg1[%25, %c0_18, %c0_19] : memref<8x8x16xf32, #tpu.memory_space<vmem>>, vector<1x8x16xf32>
      %27 = vector.shape_cast %26 : vector<1x8x16xf32> to vector<8x16xf32>
      %c0_20 = arith.constant 0 : index
      %c0_21 = arith.constant 0 : index
      %28 = vector.load %arg3[%c0_20, %c0_21] : memref<16x96xbf16, #tpu.memory_space<vmem>>, vector<16x96xbf16>
      %c0_22 = arith.constant 0 : index
      %c0_23 = arith.constant 0 : index
      %29 = vector.load %arg4[%c0_22, %c0_23] : memref<32x96xbf16, #tpu.memory_space<vmem>>, vector<32x96xbf16>
      %c0_24 = arith.constant 0 : index
      %c0_25 = arith.constant 0 : index
      %30 = vector.load %arg5[%c0_24, %c0_25] : memref<1x96xf32, #tpu.memory_space<vmem>>, vector<1x96xf32>
      %c0_26 = arith.constant 0 : index
      %c0_27 = arith.constant 0 : index
      %31 = vector.load %arg6[%c0_26, %c0_27] : memref<1x32xf32, #tpu.memory_space<vmem>>, vector<1x32xf32>
      %32 = arith.truncf %27 : vector<8x16xf32> to vector<8x16xbf16>
      %cst = arith.constant dense<0.000000e+00> : vector<8x96xf32>
      %33 = tpu.matmul %32, %28, %cst {dimension_numbers = #tpu.dot_dimension_numbers<[1], [0], [0], [1], [0, 0, 1, 1], [], []>} : vector<8x16xbf16>, vector<16x96xbf16>, vector<8x96xf32> -> vector<8x96xf32>
      %34 = vector.broadcast %30 : vector<1x96xf32> to vector<8x96xf32>
      %35 = arith.addf %33, %34 : vector<8x96xf32>
      %36 = arith.truncf %arg16 : vector<8x32xf32> to vector<8x32xbf16>
      %cst_28 = arith.constant dense<0.000000e+00> : vector<8x96xf32>
      %37 = tpu.matmul %36, %29, %cst_28 {dimension_numbers = #tpu.dot_dimension_numbers<[1], [0], [0], [1], [0, 0, 1, 1], [], []>} : vector<8x32xbf16>, vector<32x96xbf16>, vector<8x96xf32> -> vector<8x96xf32>
      %38 = vector.extract_strided_slice %35 {offsets = [0, 0], sizes = [8, 32], strides = [1, 1]} : vector<8x96xf32> to vector<8x32xf32>
      %39 = vector.extract_strided_slice %37 {offsets = [0, 0], sizes = [8, 32], strides = [1, 1]} : vector<8x96xf32> to vector<8x32xf32>
      %40 = arith.addf %38, %39 : vector<8x32xf32>
      %41 = arith.negf %40 : vector<8x32xf32>
      %42 = math.exp %41 : vector<8x32xf32>
      %cst_29 = arith.constant 1.000000e+00 : f32
      %43 = vector.broadcast %cst_29 : f32 to vector<8x32xf32>
      %44 = arith.addf %43, %42 : vector<8x32xf32>
      %45 = arith.divf %43, %44 : vector<8x32xf32>
      %46 = vector.extract_strided_slice %35 {offsets = [0, 32], sizes = [8, 32], strides = [1, 1]} : vector<8x96xf32> to vector<8x32xf32>
      %47 = vector.extract_strided_slice %37 {offsets = [0, 32], sizes = [8, 32], strides = [1, 1]} : vector<8x96xf32> to vector<8x32xf32>
      %48 = arith.addf %46, %47 : vector<8x32xf32>
      %49 = arith.negf %48 : vector<8x32xf32>
      %50 = math.exp %49 : vector<8x32xf32>
      %cst_30 = arith.constant 1.000000e+00 : f32
      %51 = vector.broadcast %cst_30 : f32 to vector<8x32xf32>
      %52 = arith.addf %51, %50 : vector<8x32xf32>
      %53 = arith.divf %51, %52 : vector<8x32xf32>
      %54 = vector.extract_strided_slice %35 {offsets = [0, 64], sizes = [8, 32], strides = [1, 1]} : vector<8x96xf32> to vector<8x32xf32>
      %55 = vector.extract_strided_slice %37 {offsets = [0, 64], sizes = [8, 32], strides = [1, 1]} : vector<8x96xf32> to vector<8x32xf32>
      %56 = vector.broadcast %31 : vector<1x32xf32> to vector<8x32xf32>
      %57 = arith.addf %55, %56 : vector<8x32xf32>
      %58 = arith.mulf %45, %57 : vector<8x32xf32>
      %59 = arith.addf %54, %58 : vector<8x32xf32>
      %60 = math.tanh %59 : vector<8x32xf32>
      %cst_31 = arith.constant 1.000000e+00 : f32
      %61 = vector.broadcast %cst_31 : f32 to vector<8x32xf32>
      %62 = arith.subf %61, %53 : vector<8x32xf32>
      %63 = arith.mulf %62, %60 : vector<8x32xf32>
      %64 = arith.mulf %53, %arg16 : vector<8x32xf32>
      %65 = arith.addf %63, %64 : vector<8x32xf32>
      %66 = vector.broadcast %24 : vector<8x1xf32> to vector<8x32xf32>
      %67 = arith.mulf %66, %65 : vector<8x32xf32>
      %cst_32 = arith.constant 1.000000e+00 : f32
      %68 = vector.broadcast %cst_32 : f32 to vector<8x1xf32>
      %69 = arith.subf %68, %24 : vector<8x1xf32>
      %70 = vector.broadcast %69 : vector<8x1xf32> to vector<8x32xf32>
      %71 = arith.mulf %70, %arg16 : vector<8x32xf32>
      %72 = arith.addf %67, %71 : vector<8x32xf32>
      %c0_33 = arith.constant 0 : index
      %c0_34 = arith.constant 0 : index
      %73 = vector.load %arg7[%c0_33, %c0_34] : memref<32x96xbf16, #tpu.memory_space<vmem>>, vector<32x96xbf16>
      %c0_35 = arith.constant 0 : index
      %c0_36 = arith.constant 0 : index
      %74 = vector.load %arg8[%c0_35, %c0_36] : memref<32x96xbf16, #tpu.memory_space<vmem>>, vector<32x96xbf16>
      %c0_37 = arith.constant 0 : index
      %c0_38 = arith.constant 0 : index
      %75 = vector.load %arg9[%c0_37, %c0_38] : memref<1x96xf32, #tpu.memory_space<vmem>>, vector<1x96xf32>
      %c0_39 = arith.constant 0 : index
      %c0_40 = arith.constant 0 : index
      %76 = vector.load %arg10[%c0_39, %c0_40] : memref<1x32xf32, #tpu.memory_space<vmem>>, vector<1x32xf32>
      %77 = arith.truncf %72 : vector<8x32xf32> to vector<8x32xbf16>
      %cst_41 = arith.constant dense<0.000000e+00> : vector<8x96xf32>
      %78 = tpu.matmul %77, %73, %cst_41 {dimension_numbers = #tpu.dot_dimension_numbers<[1], [0], [0], [1], [0, 0, 1, 1], [], []>} : vector<8x32xbf16>, vector<32x96xbf16>, vector<8x96xf32> -> vector<8x96xf32>
      %79 = vector.broadcast %75 : vector<1x96xf32> to vector<8x96xf32>
      %80 = arith.addf %78, %79 : vector<8x96xf32>
      %81 = arith.truncf %arg17 : vector<8x32xf32> to vector<8x32xbf16>
      %cst_42 = arith.constant dense<0.000000e+00> : vector<8x96xf32>
      %82 = tpu.matmul %81, %74, %cst_42 {dimension_numbers = #tpu.dot_dimension_numbers<[1], [0], [0], [1], [0, 0, 1, 1], [], []>} : vector<8x32xbf16>, vector<32x96xbf16>, vector<8x96xf32> -> vector<8x96xf32>
      %83 = vector.extract_strided_slice %80 {offsets = [0, 0], sizes = [8, 32], strides = [1, 1]} : vector<8x96xf32> to vector<8x32xf32>
      %84 = vector.extract_strided_slice %82 {offsets = [0, 0], sizes = [8, 32], strides = [1, 1]} : vector<8x96xf32> to vector<8x32xf32>
      %85 = arith.addf %83, %84 : vector<8x32xf32>
      %86 = arith.negf %85 : vector<8x32xf32>
      %87 = math.exp %86 : vector<8x32xf32>
      %cst_43 = arith.constant 1.000000e+00 : f32
      %88 = vector.broadcast %cst_43 : f32 to vector<8x32xf32>
      %89 = arith.addf %88, %87 : vector<8x32xf32>
      %90 = arith.divf %88, %89 : vector<8x32xf32>
      %91 = vector.extract_strided_slice %80 {offsets = [0, 32], sizes = [8, 32], strides = [1, 1]} : vector<8x96xf32> to vector<8x32xf32>
      %92 = vector.extract_strided_slice %82 {offsets = [0, 32], sizes = [8, 32], strides = [1, 1]} : vector<8x96xf32> to vector<8x32xf32>
      %93 = arith.addf %91, %92 : vector<8x32xf32>
      %94 = arith.negf %93 : vector<8x32xf32>
      %95 = math.exp %94 : vector<8x32xf32>
      %cst_44 = arith.constant 1.000000e+00 : f32
      %96 = vector.broadcast %cst_44 : f32 to vector<8x32xf32>
      %97 = arith.addf %96, %95 : vector<8x32xf32>
      %98 = arith.divf %96, %97 : vector<8x32xf32>
      %99 = vector.extract_strided_slice %80 {offsets = [0, 64], sizes = [8, 32], strides = [1, 1]} : vector<8x96xf32> to vector<8x32xf32>
      %100 = vector.extract_strided_slice %82 {offsets = [0, 64], sizes = [8, 32], strides = [1, 1]} : vector<8x96xf32> to vector<8x32xf32>
      %101 = vector.broadcast %76 : vector<1x32xf32> to vector<8x32xf32>
      %102 = arith.addf %100, %101 : vector<8x32xf32>
      %103 = arith.mulf %90, %102 : vector<8x32xf32>
      %104 = arith.addf %99, %103 : vector<8x32xf32>
      %105 = math.tanh %104 : vector<8x32xf32>
      %cst_45 = arith.constant 1.000000e+00 : f32
      %106 = vector.broadcast %cst_45 : f32 to vector<8x32xf32>
      %107 = arith.subf %106, %98 : vector<8x32xf32>
      %108 = arith.mulf %107, %105 : vector<8x32xf32>
      %109 = arith.mulf %98, %arg17 : vector<8x32xf32>
      %110 = arith.addf %108, %109 : vector<8x32xf32>
      %111 = vector.broadcast %24 : vector<8x1xf32> to vector<8x32xf32>
      %112 = arith.mulf %111, %110 : vector<8x32xf32>
      %cst_46 = arith.constant 1.000000e+00 : f32
      %113 = vector.broadcast %cst_46 : f32 to vector<8x1xf32>
      %114 = arith.subf %113, %24 : vector<8x1xf32>
      %115 = vector.broadcast %114 : vector<8x1xf32> to vector<8x32xf32>
      %116 = arith.mulf %115, %arg17 : vector<8x32xf32>
      %117 = arith.addf %112, %116 : vector<8x32xf32>
      scf.yield %72, %117 : vector<8x32xf32>, vector<8x32xf32>
    }
    %c8_i32_9 = arith.constant 8 : i32
    %c0_10 = arith.constant 0 : index
    %c0_11 = arith.constant 0 : index
    %c0_12 = arith.constant 0 : index
    %11 = vector.load %arg14[%c0_10, %c0_11, %c0_12] : memref<2x8x32xf32, #tpu.memory_space<vmem>>, vector<1x8x32xf32>
    %12 = vector.shape_cast %11 : vector<1x8x32xf32> to vector<8x32xf32>
    %13 = vector.shape_cast %10#0 : vector<8x32xf32> to vector<1x8x32xf32>
    tpu.vector_store %arg14[%c0_10, %c0_11, %c0_12], %13 {strides = array<i32>} : memref<2x8x32xf32, #tpu.memory_space<vmem>>, vector<1x8x32xf32>,
    %c1_13 = arith.constant 1 : index
    %c0_14 = arith.constant 0 : index
    %c0_15 = arith.constant 0 : index
    %14 = vector.load %arg14[%c1_13, %c0_14, %c0_15] : memref<2x8x32xf32, #tpu.memory_space<vmem>>, vector<1x8x32xf32>
    %15 = vector.shape_cast %14 : vector<1x8x32xf32> to vector<8x32xf32>
    %16 = vector.shape_cast %10#1 : vector<8x32xf32> to vector<1x8x32xf32>
    tpu.vector_store %arg14[%c1_13, %c0_14, %c0_15], %16 {strides = array<i32>} : memref<2x8x32xf32, #tpu.memory_space<vmem>>, vector<1x8x32xf32>,
    %c0_i32_16 = arith.constant 0 : i32
    %17 = arith.cmpi eq, %arg0, %c0_i32_16 : i32
    %18 = arith.extui %17 : i1 to i32
    %c0_i32_17 = arith.constant 0 : i32
    %19 = arith.cmpi ne, %18, %c0_i32_17 : i32
    scf.if %19 {
      %20 = arith.truncf %10#1 : vector<8x32xf32> to vector<8x32xbf16>
      %c0_18 = arith.constant 0 : index
      %c0_19 = arith.constant 0 : index
      %21 = vector.load %arg11[%c0_18, %c0_19] : memref<32x8xbf16, #tpu.memory_space<vmem>>, vector<32x8xbf16>
      %cst = arith.constant dense<0.000000e+00> : vector<8x8xf32>
      %22 = tpu.matmul %20, %21, %cst {dimension_numbers = #tpu.dot_dimension_numbers<[1], [0], [0], [1], [0, 0, 1, 1], [], []>} : vector<8x32xbf16>, vector<32x8xbf16>, vector<8x8xf32> -> vector<8x8xf32>
      %c0_20 = arith.constant 0 : index
      %c0_21 = arith.constant 0 : index
      %23 = vector.load %arg12[%c0_20, %c0_21] : memref<1x8xf32, #tpu.memory_space<vmem>>, vector<1x8xf32>
      %24 = vector.broadcast %23 : vector<1x8xf32> to vector<8x8xf32>
      %25 = arith.addf %22, %24 : vector<8x8xf32>
      %c0_22 = arith.constant 0 : index
      %c0_23 = arith.constant 0 : index
      %26 = vector.load %arg13[%c0_22, %c0_23] : memref<8x8xf32, #tpu.memory_space<vmem>>, vector<8x8xf32>
      tpu.vector_store %arg13[%c0_22, %c0_23], %25 {strides = array<i32>} : memref<8x8xf32, #tpu.memory_space<vmem>>, vector<8x8xf32>,
    } else {
    }
    return
  }
  func.func @transform_0(%arg0: i32) -> (i32, i32, i32) {
    %c0_i32 = arith.constant 0 : i32
    %c0_i32_0 = arith.constant 0 : i32
    %c0_i32_1 = arith.constant 0 : i32
    return %arg0, %c0_i32, %c0_i32_0 : i32, i32, i32
  }
  func.func @transform_1(%arg0: i32) -> (i32, i32) {
    %c0_i32 = arith.constant 0 : i32
    %c0_i32_0 = arith.constant 0 : i32
    %c0_i32_1 = arith.constant 0 : i32
    return %c0_i32, %c0_i32_0 : i32, i32
  }
  func.func @transform_2(%arg0: i32) -> (i32, i32) {
    %c0_i32 = arith.constant 0 : i32
    %c0_i32_0 = arith.constant 0 : i32
    %c0_i32_1 = arith.constant 0 : i32
    return %c0_i32, %c0_i32_0 : i32, i32
  }
  func.func @transform_3(%arg0: i32) -> (i32, i32) {
    %c0_i32 = arith.constant 0 : i32
    %c0_i32_0 = arith.constant 0 : i32
    %c0_i32_1 = arith.constant 0 : i32
    return %c0_i32, %c0_i32_0 : i32, i32
  }
  func.func @transform_4(%arg0: i32) -> (i32, i32) {
    %c0_i32 = arith.constant 0 : i32
    %c0_i32_0 = arith.constant 0 : i32
    %c0_i32_1 = arith.constant 0 : i32
    return %c0_i32, %c0_i32_0 : i32, i32
  }
  func.func @transform_5(%arg0: i32) -> (i32, i32) {
    %c0_i32 = arith.constant 0 : i32
    %c0_i32_0 = arith.constant 0 : i32
    %c0_i32_1 = arith.constant 0 : i32
    return %c0_i32, %c0_i32_0 : i32, i32
  }
  func.func @transform_6(%arg0: i32) -> (i32, i32) {
    %c0_i32 = arith.constant 0 : i32
    %c0_i32_0 = arith.constant 0 : i32
    %c0_i32_1 = arith.constant 0 : i32
    return %c0_i32, %c0_i32_0 : i32, i32
  }
  func.func @transform_7(%arg0: i32) -> (i32, i32) {
    %c0_i32 = arith.constant 0 : i32
    %c0_i32_0 = arith.constant 0 : i32
    %c0_i32_1 = arith.constant 0 : i32
    return %c0_i32, %c0_i32_0 : i32, i32
  }
  func.func @transform_8(%arg0: i32) -> (i32, i32) {
    %c0_i32 = arith.constant 0 : i32
    %c0_i32_0 = arith.constant 0 : i32
    %c0_i32_1 = arith.constant 0 : i32
    return %c0_i32, %c0_i32_0 : i32, i32
  }
  func.func @transform_9(%arg0: i32) -> (i32, i32) {
    %c0_i32 = arith.constant 0 : i32
    %c0_i32_0 = arith.constant 0 : i32
    %c0_i32_1 = arith.constant 0 : i32
    return %c0_i32, %c0_i32_0 : i32, i32
  }
  func.func @transform_10(%arg0: i32) -> (i32, i32) {
    %c0_i32 = arith.constant 0 : i32
    %c0_i32_0 = arith.constant 0 : i32
    %c0_i32_1 = arith.constant 0 : i32
    return %c0_i32, %c0_i32_0 : i32, i32
  }
  func.func @transform_11(%arg0: i32) -> (i32, i32) {
    %c0_i32 = arith.constant 0 : i32
    %c0_i32_0 = arith.constant 0 : i32
    %c0_i32_1 = arith.constant 0 : i32
    return %c0_i32, %c0_i32_0 : i32, i32
  }
  func.func @transform_12(%arg0: i32) -> (i32, i32) {
    %c0_i32 = arith.constant 0 : i32
    %c0_i32_0 = arith.constant 0 : i32
    %c0_i32_1 = arith.constant 0 : i32
    return %c0_i32, %c0_i32_0 : i32, i32
  }
}

</mosaic_0001>

<llo_original>
// kernel: tpu_custom_call.1
$region0: #{tpu_custom_call.1}
  #allocation0 [shape = 'u32[]', space=smem, size = 0x4, offset = 0x4, fixed_abs, tag = 'smem constant byte address 0x4 - core index']
  #allocation1 [shape = 'u32[72,128]{1,0:T(1,128)}', space=vmem, size = 0x9000, scoped, tag = 'internal scratch']
  #allocation2 [shape = 'f32[2,8,32]{2,1,0:T(8,128)}', space=vmem, size = 0x2000, scoped, tag = 'scratch operand']
  %s0 = inlined_call_operand.hbm [shape: f32[8,8,16], index: 0, kind: input, shape index: {}]
  %s1 = inlined_call_operand.vmem [shape: s32[8,1], index: 1, kind: input, shape index: {}]
  %s2 = inlined_call_operand.vmem [shape: bf16[16,96], index: 2, kind: input, shape index: {}]
  %s3 = inlined_call_operand.vmem [shape: bf16[32,96], index: 3, kind: input, shape index: {}]
  %s4 = inlined_call_operand.vmem [shape: f32[1,96], index: 4, kind: input, shape index: {}]
  %s5 = inlined_call_operand.vmem [shape: f32[1,32], index: 5, kind: input, shape index: {}]
  %s6 = inlined_call_operand.hbm [shape: bf16[32,96], index: 6, kind: input, shape index: {}]
  %s7 = inlined_call_operand.hbm [shape: bf16[32,96], index: 7, kind: input, shape index: {}]
  %s8 = inlined_call_operand.vmem [shape: f32[1,96], index: 8, kind: input, shape index: {}]
  %s9 = inlined_call_operand.vmem [shape: f32[1,32], index: 9, kind: input, shape index: {}]
  %s10 = inlined_call_operand.vmem [shape: bf16[32,8], index: 10, kind: input, shape index: {}]
  %s11 = inlined_call_operand.vmem [shape: f32[1,8], index: 11, kind: input, shape index: {}]
  %s12 = inlined_call_operand.hbm [shape: f32[8,8], index: 12, kind: output, shape index: {}]
  %s13 = sld [smem:[#allocation0]]
  $region85: #{tpu_custom_call.1} parent=0
    _
  %s15 = ssub.s32 1, %s13
  %s16 = scalar_select 0, %s15, %s13
  $region1: #{tpu_custom_call.1} parent=0
    #allocation3 [shape = 'u8[32768]{0}', space=vmem, size = 0x8000, scoped, tag = 'input window, operand 0, single buffered']
    #allocation4 [shape = 's32[1]{0}', space=sflag, size = 0x4, scoped, tag = 'scoped memory for tpu_custom_call.1']
    #allocation5 [shape = 's32[1]{0}', space=sflag, size = 0x4, scoped, tag = 'scoped memory for tpu_custom_call.1']
    #allocation6 [shape = 'u8[8192]{0}', space=vmem, size = 0x2000, scoped, tag = 'input window, operand 6, single buffered']
    #allocation7 [shape = 's32[1]{0}', space=sflag, size = 0x4, scoped, tag = 'scoped memory for tpu_custom_call.1']
    #allocation8 [shape = 'u8[8192]{0}', space=vmem, size = 0x2000, scoped, tag = 'input window, operand 7, single buffered']
    #allocation9 [shape = 'u8[4096]{0}', space=vmem, size = 0x1000, scoped, tag = 'output window, operand 0, single buffered']
    %17 = vsyncpa [#allocation4], 0
    %18 = vsyncpa [#allocation7], 0
    %19 = vsyncpa [#allocation5], 0
    // Predicated region
    $region2: #{tpu_custom_call.1} parent=1 // pred_check
      _
    $region3: #{tpu_custom_call.1} parent=1 // pred_check_branch
      %21 = sbr.rel (0) target = $region5
    $region4: #{tpu_custom_call.1} parent=1 // pred_region
      %23 = vsyncadd [#allocation4], 0
      %s24 = sshll.u32 %s0, 4
      %s25 = int_to_ptr.hbm [resolvable:$true] %s24
      %s26 = sshll.u32 [#allocation3], 4
      %s27 = int_to_ptr.vmem [resolvable:$true] %s26
      %32 = dma.hbm_to_vmem [thread:$0]  %s25, 1024, %s27, [#allocation4], 128, 128, 8
    $region5: #{tpu_custom_call.1} parent=1 // pred_fallthru
      _
    // Predicated region
    $region6: #{tpu_custom_call.1} parent=1 // pred_check
      _
    $region7: #{tpu_custom_call.1} parent=1 // pred_check_branch
      %34 = sbr.rel (0) target = $region9
    $region8: #{tpu_custom_call.1} parent=1 // pred_region
      _
    $region9: #{tpu_custom_call.1} parent=1 // pred_fallthru
      _
    // Predicated region
    $region10: #{tpu_custom_call.1} parent=1 // pred_check
      _
    $region11: #{tpu_custom_call.1} parent=1 // pred_check_branch
      %36 = sbr.rel (0) target = $region13
    $region12: #{tpu_custom_call.1} parent=1 // pred_region
      _
    $region13: #{tpu_custom_call.1} parent=1 // pred_fallthru
      _
    // Predicated region
    $region14: #{tpu_custom_call.1} parent=1 // pred_check
      _
    $region15: #{tpu_custom_call.1} parent=1 // pred_check_branch
      %38 = sbr.rel (0) target = $region17
    $region16: #{tpu_custom_call.1} parent=1 // pred_region
      _
    $region17: #{tpu_custom_call.1} parent=1 // pred_fallthru
      _
    // Predicated region
    $region18: #{tpu_custom_call.1} parent=1 // pred_check
      _
    $region19: #{tpu_custom_call.1} parent=1 // pred_check_branch
      %40 = sbr.rel (0) target = $region21
    $region20: #{tpu_custom_call.1} parent=1 // pred_region
      _
    $region21: #{tpu_custom_call.1} parent=1 // pred_fallthru
      _
    // Predicated region
    $region22: #{tpu_custom_call.1} parent=1 // pred_check
      _
    $region23: #{tpu_custom_call.1} parent=1 // pred_check_branch
      %42 = sbr.rel (0) target = $region25
    $region24: #{tpu_custom_call.1} parent=1 // pred_region
      _
    $region25: #{tpu_custom_call.1} parent=1 // pred_fallthru
      _
    // Predicated region
    $region26: #{tpu_custom_call.1} parent=1 // pred_check
      _
    $region27: #{tpu_custom_call.1} parent=1 // pred_check_branch
      %44 = sbr.rel (0) target = $region29
    $region28: #{tpu_custom_call.1} parent=1 // pred_region
      %46 = vsyncadd [#allocation7], 0
      %s47 = sshll.u32 %s6, 4
      %s48 = int_to_ptr.hbm [resolvable:$true] %s47
      %s49 = sshll.u32 [#allocation6], 4
      %s50 = int_to_ptr.vmem [resolvable:$true] %s49
      %55 = dma.hbm_to_vmem [thread:$0]  %s48, 256, %s50, [#allocation7], 64, 64, 4
    $region29: #{tpu_custom_call.1} parent=1 // pred_fallthru
      _
    // Predicated region
    $region30: #{tpu_custom_call.1} parent=1 // pred_check
      _
    $region31: #{tpu_custom_call.1} parent=1 // pred_check_branch
      %57 = sbr.rel (0) target = $region33
    $region32: #{tpu_custom_call.1} parent=1 // pred_region
      %59 = vsyncadd [#allocation7], 0
      %s60 = sshll.u32 %s7, 4
      %s61 = int_to_ptr.hbm [resolvable:$true] %s60
      %s62 = sshll.u32 [#allocation8], 4
      %s63 = int_to_ptr.vmem [resolvable:$true] %s62
      %68 = dma.hbm_to_vmem [thread:$0]  %s61, 256, %s63, [#allocation7], 64, 64, 4
    $region33: #{tpu_custom_call.1} parent=1 // pred_fallthru
      _
    // Predicated region
    $region34: #{tpu_custom_call.1} parent=1 // pred_check
      _
    $region35: #{tpu_custom_call.1} parent=1 // pred_check_branch
      %70 = sbr.rel (0) target = $region37
    $region36: #{tpu_custom_call.1} parent=1 // pred_region
      _
    $region37: #{tpu_custom_call.1} parent=1 // pred_fallthru
      _
    // Predicated region
    $region38: #{tpu_custom_call.1} parent=1 // pred_check
      _
    $region39: #{tpu_custom_call.1} parent=1 // pred_check_branch
      %72 = sbr.rel (0) target = $region41
    $region40: #{tpu_custom_call.1} parent=1 // pred_region
      _
    $region41: #{tpu_custom_call.1} parent=1 // pred_fallthru
      _
    // Predicated region
    $region42: #{tpu_custom_call.1} parent=1 // pred_check
      _
    $region43: #{tpu_custom_call.1} parent=1 // pred_check_branch
      %74 = sbr.rel (0) target = $region45
    $region44: #{tpu_custom_call.1} parent=1 // pred_region
      _
    $region45: #{tpu_custom_call.1} parent=1 // pred_fallthru
      _
    // Predicated region
    $region46: #{tpu_custom_call.1} parent=1 // pred_check
      _
    $region47: #{tpu_custom_call.1} parent=1 // pred_check_branch
      %76 = sbr.rel (0) target = $region49
    $region48: #{tpu_custom_call.1} parent=1 // pred_region
      _
    $region49: #{tpu_custom_call.1} parent=1 // pred_fallthru
      _
    // Predicated region
    $region50: #{tpu_custom_call.1} parent=1 // pred_check
      _
    $region51: #{tpu_custom_call.1} parent=1 // pred_check_branch
      %78 = sbr.rel (0) target = $region53
    $region52: #{tpu_custom_call.1} parent=1 // pred_region
      %80 = dma.done [#allocation4], 1024
    $region53: #{tpu_custom_call.1} parent=1 // pred_fallthru
      _
    // Predicated region
    $region54: #{tpu_custom_call.1} parent=1 // pred_check
      _
    $region55: #{tpu_custom_call.1} parent=1 // pred_check_branch
      %82 = sbr.rel (0) target = $region57
    $region56: #{tpu_custom_call.1} parent=1 // pred_region
      %84 = dma.done [#allocation7], 256
    $region57: #{tpu_custom_call.1} parent=1 // pred_fallthru
      _
    // Predicated region
    $region58: #{tpu_custom_call.1} parent=1 // pred_check
      _
    $region59: #{tpu_custom_call.1} parent=1 // pred_check_branch
      %86 = sbr.rel (0) target = $region61
    $region60: #{tpu_custom_call.1} parent=1 // pred_region
      %88 = dma.done [#allocation7], 256
    $region61: #{tpu_custom_call.1} parent=1 // pred_fallthru
      _
    %p90 = scmp.eq.s32.totalorder 0, 0
    // Predicated region
    $region62: #{tpu_custom_call.1} parent=1 // pred_check
      %p91 = pneg %p90
    $region63: #{tpu_custom_call.1} parent=1 // pred_check_branch
      %93 = sbr.rel (%p91) target = $region65
    $region64: #{tpu_custom_call.1} parent=1 // pred_region
      %vm94 = vcmask 261120
      %95 = vst.msk [vmem:[#allocation2] sm:$0xff] %vm94, 0.0
      %96 = vst.msk [vmem:[#allocation2 + $0x8] sm:$0xff] %vm94, 0.0
    $region65: #{tpu_custom_call.1} parent=1 // pred_fallthru
      _
    %s97 = smul.u32 0, 8
    %v98 = vld [vmem:[%s1] sm:$0xff]
    %v99 = vld [vmem:[#allocation2] sm:$0xff]
    %s100 = scalar_lea.vmem [#allocation2], 8
    %v101 = vld [vmem:[%s100] sm:$0xff]
    loop: start=0, step=1, limit=8
    $region66: #{tpu_custom_call.1} parent=1 // loop_pre_header
      _
    $region67: #{tpu_custom_call.1} parent=1 // loop_header
      %s103 = sphi 0, %s107
      %p104 = scmp.ge.s32.totalorder %s103, 8
      %v108 = vphi %v99, %v382
      %v109 = vphi %v101, %v386
    $region68: #{tpu_custom_call.1} parent=1 // loop_header_branch
      %106 = sbr.rel (%p104) target = $region72
    $region69: #{tpu_custom_call.1} parent=1 // loop_body
      %s110 = sadd.s32 %s97, %s103
      %v111 = vstv %s110
      %vm112 = vcmp.lt.s32.totalorder %v111, %v98
      %v113 = vsel %vm112, 1, 0
      %v114 = vcvt.s32.f32 %v113
      %s115 = smul.u32 %s103, 8
      %s116 = scalar_lea.vmem [#allocation3], %s115
      %v117 = vld [vmem:[%s116] sm:$0xff]
      %v118 = vld [vmem:[%s2] sm:$0xf]
      %v119 = vld [vmem:[%s2 + $0x4] sm:$0xf]
      %v120 = vld [vmem:[%s3] sm:$0xf]
      %v121 = vld [vmem:[%s3 + $0x4] sm:$0xf]
      %v122 = vld [vmem:[%s3 + $0x8] sm:$0xf]
      %v123 = vld [vmem:[%s3 + $0xc] sm:$0xf]
      %v124 = vld [vmem:[%s4] sm:$0x1]
      %v125 = vld [vmem:[%s5] sm:$0x1]
      %v126 = vpack.c.bf16 %v117, %v117
      %v128 = vperm.slane %v124, 0
      %v132 = vunpack.c.l.b16 %v118
      %v133 = vunpack.c.l.b16 %v119
      %v134 = vpack.c.b16 %v133, %v132
      %vm136 = vcmask 130048
      %v138 = vsel %vm136, %v126, 0
      %140 = vmatpush.bf16.msra.mxu0 0
      %141 = vmatpush.bf16.msra.mxu0 0
      %142 = vmatpush.bf16.msra.mxu0 0
      %143 = vmatpush.bf16.msra.mxu0 0
      %144 = vmatpush.bf16.msra.mxu0 0
      %145 = vmatpush.bf16.msra.mxu0 0
      %146 = vmatpush.bf16.msra.mxu0 0
      %147 = vmatpush.bf16.msra.mxu0 %v134
      %148 = vmatmul.bf16.gmra.mxu0 %v138
      %v149 = vpop.f32.mrf.mxu0
      %v150 = vadd.f32 %v128, %v149
      %v151 = vpop.f32.mrf.mxu0
      %152 = vdwg.mxu0
      %v153 = vpack.c.bf16 %v108, %v108
      %v158 = vunpack.c.l.b16 %v120
      %v159 = vunpack.c.l.b16 %v121
      %v160 = vunpack.c.l.b16 %v122
      %v161 = vunpack.c.l.b16 %v123
      %v162 = vpack.c.b16 %v159, %v158
      %v163 = vpack.c.b16 %v161, %v160
      %vm166 = vcmask 261120
      %v168 = vsel %vm166, %v153, 0
      %170 = vmatpush.bf16.msra.mxu0 0
      %171 = vmatpush.bf16.msra.mxu0 0
      %172 = vmatpush.bf16.msra.mxu0 0
      %173 = vmatpush.bf16.msra.mxu0 0
      %174 = vmatpush.bf16.msra.mxu0 0
      %175 = vmatpush.bf16.msra.mxu0 0
      %176 = vmatpush.bf16.msra.mxu0 %v163
      %177 = vmatpush.bf16.msra.mxu0 %v162
      %178 = vmatmul.bf16.gmra.mxu0 %v168
      %v179 = vpop.f32.mrf.mxu0
      %v180 = vadd.f32 0.0, %v179
      %v181 = vpop.f32.mrf.mxu0
      %182 = vdwg.mxu0
      %v183 = vadd.f32 %v150, %v180
      %v184 = vxor.u32 %v183, 2147483648
      %v185 = vmul.f32 %v184, 1.442695
      %v186 = vpow.pop %v185
      %v187 = vadd.f32 %v186, 1.0
      %v188 = vrcp.pop %v187
      %v189 = vmul.f32 %v187, %v188
      %v190 = vsub.f32 1.0, %v189
      %v191 = vmul.f32 %v188, %v190
      %v192 = vadd.f32 %v188, %v191
      %vm193 = vweird.f32 %v187
      %vm194 = vweird.f32 %v188
      %vm195 = vmor %vm193, %vm194
      %v196 = vsel %vm195, %v188, %v192
      %v197 = vand.u32 2147483647, %v187
      %vm198 = vcmp.eq.f32.partialorder %v197, 8.507059e+37
      %v199 = vand.u32 %v187, 2147483648
      %v200 = vor.u32 1.1754944e-38, %v199
      %v201 = vsel %vm198, %v200, %v196
      %v202 = vmul.f32 1.0, %v201
      %v204 = vperm.slane %v125, 0
      %205 = vrot.lane.b32.xlu0 %v204, 64
      %v206 = vpop.permute.xlu0 %205
      %v208 = vadd.f32 %v180, %v206
      %210 = vrot.lane.b32.xlu0 %v208, 64
      %v211 = vpop.permute.xlu0 %210
      %v213 = vmul.f32 %v202, %v211
      %215 = vrot.lane.b32.xlu0 %v213, 64
      %v216 = vpop.permute.xlu0 %215
      %v218 = vadd.f32 %v150, %v216
      %v219 = vtanh.pop %v218
      %v220 = vsub.f32 1.0, %v202
      %222 = vrot.lane.b32.xlu0 %v219, 96
      %v223 = vpop.permute.xlu0 %222
      %v225 = vmul.f32 %v220, %v223
      %227 = vrot.lane.b32.xlu0 %v108, 32
      %v228 = vpop.permute.xlu0 %227
      %v230 = vmul.f32 %v202, %v228
      %v231 = vadd.f32 %v225, %v230
      %233 = vset.pattern.permute.xlu0 0
      %234 = vperm.xlu0 %233, %v114
      %v235 = vpop.permute.xlu0 %234
      %v237 = vmul.f32 %v235, %v231
      %v238 = vsub.f32 1.0, %v114
      %240 = vset.pattern.permute.xlu0 0
      %241 = vperm.xlu0 %240, %v238
      %v242 = vpop.permute.xlu0 %241
      %v244 = vmul.f32 %v242, %v108
      %246 = vrot.lane.b32.xlu0 %v244, 32
      %v247 = vpop.permute.xlu0 %246
      %v249 = vadd.f32 %v237, %v247
      %v250 = vld [vmem:[#allocation6] sm:$0xf]
      %v251 = vld [vmem:[#allocation6 + $0x4] sm:$0xf]
      %v252 = vld [vmem:[#allocation6 + $0x8] sm:$0xf]
      %v253 = vld [vmem:[#allocation6 + $0xc] sm:$0xf]
      %v254 = vld [vmem:[#allocation8] sm:$0xf]
      %v255 = vld [vmem:[#allocation8 + $0x4] sm:$0xf]
      %v256 = vld [vmem:[#allocation8 + $0x8] sm:$0xf]
      %v257 = vld [vmem:[#allocation8 + $0xc] sm:$0xf]
      %v258 = vld [vmem:[%s8] sm:$0x1]
      %v259 = vld [vmem:[%s9] sm:$0x1]
      %v260 = vpack.c.bf16 %v249, %v249
      %v262 = vperm.slane %v258, 0
      %265 = vrot.lane.b32.xlu0 %v260, 96
      %v266 = vpop.permute.xlu0 %265
      %v271 = vunpack.c.l.b16 %v250
      %v272 = vunpack.c.l.b16 %v251
      %v273 = vunpack.c.l.b16 %v252
      %v274 = vunpack.c.l.b16 %v253
      %v275 = vpack.c.b16 %v272, %v271
      %v276 = vpack.c.b16 %v274, %v273
      %v280 = vsel %vm166, %v266, 0
      %282 = vmatpush.bf16.msra.mxu0 0
      %283 = vmatpush.bf16.msra.mxu0 0
      %284 = vmatpush.bf16.msra.mxu0 0
      %285 = vmatpush.bf16.msra.mxu0 0
      %286 = vmatpush.bf16.msra.mxu0 0
      %287 = vmatpush.bf16.msra.mxu0 0
      %288 = vmatpush.bf16.msra.mxu0 %v276
      %289 = vmatpush.bf16.msra.mxu0 %v275
      %290 = vmatmul.bf16.gmra.mxu0 %v280
      %v291 = vpop.f32.mrf.mxu0
      %v292 = vadd.f32 %v262, %v291
      %v293 = vpop.f32.mrf.mxu0
      %294 = vdwg.mxu0
      %v295 = vpack.c.bf16 %v109, %v109
      %v300 = vunpack.c.l.b16 %v254
      %v301 = vunpack.c.l.b16 %v255
      %v302 = vunpack.c.l.b16 %v256
      %v303 = vunpack.c.l.b16 %v257
      %v304 = vpack.c.b16 %v301, %v300
      %v305 = vpack.c.b16 %v303, %v302
      %v309 = vsel %vm166, %v295, 0
      %311 = vmatpush.bf16.msra.mxu0 0
      %312 = vmatpush.bf16.msra.mxu0 0
      %313 = vmatpush.bf16.msra.mxu0 0
      %314 = vmatpush.bf16.msra.mxu0 0
      %315 = vmatpush.bf16.msra.mxu0 0
      %316 = vmatpush.bf16.msra.mxu0 0
      %317 = vmatpush.bf16.msra.mxu0 %v305
      %318 = vmatpush.bf16.msra.mxu0 %v304
      %319 = vmatmul.bf16.gmra.mxu0 %v309
      %v320 = vpop.f32.mrf.mxu0
      %v321 = vadd.f32 0.0, %v320
      %v322 = vpop.f32.mrf.mxu0
      %323 = vdwg.mxu0
      %v324 = vadd.f32 %v292, %v321
      %v325 = vxor.u32 %v324, 2147483648
      %v326 = vmul.f32 %v325, 1.442695
      %v327 = vpow.pop %v326
      %v328 = vadd.f32 %v327, 1.0
      %v329 = vrcp.pop %v328
      %v330 = vmul.f32 %v328, %v329
      %v331 = vsub.f32 1.0, %v330
      %v332 = vmul.f32 %v329, %v331
      %v333 = vadd.f32 %v329, %v332
      %vm334 = vweird.f32 %v328
      %vm335 = vweird.f32 %v329
      %vm336 = vmor %vm334, %vm335
      %v337 = vsel %vm336, %v329, %v333
      %v338 = vand.u32 2147483647, %v328
      %vm339 = vcmp.eq.f32.partialorder %v338, 8.507059e+37
      %v340 = vand.u32 %v328, 2147483648
      %v341 = vor.u32 1.1754944e-38, %v340
      %v342 = vsel %vm339, %v341, %v337
      %v343 = vmul.f32 1.0, %v342
      %v345 = vperm.slane %v259, 0
      %346 = vrot.lane.b32.xlu0 %v345, 64
      %v347 = vpop.permute.xlu0 %346
      %v349 = vadd.f32 %v321, %v347
      %351 = vrot.lane.b32.xlu0 %v349, 64
      %v352 = vpop.permute.xlu0 %351
      %v354 = vmul.f32 %v343, %v352
      %356 = vrot.lane.b32.xlu0 %v354, 64
      %v357 = vpop.permute.xlu0 %356
      %v359 = vadd.f32 %v292, %v357
      %v360 = vtanh.pop %v359
      %v361 = vsub.f32 1.0, %v343
      %363 = vrot.lane.b32.xlu0 %v360, 96
      %v364 = vpop.permute.xlu0 %363
      %v366 = vmul.f32 %v361, %v364
      %368 = vrot.lane.b32.xlu0 %v109, 32
      %v369 = vpop.permute.xlu0 %368
      %v371 = vmul.f32 %v343, %v369
      %v372 = vadd.f32 %v366, %v371
      %v373 = vmul.f32 %v235, %v372
      %v374 = vmul.f32 %v242, %v109
      %376 = vrot.lane.b32.xlu0 %v374, 32
      %v377 = vpop.permute.xlu0 %376
      %v379 = vadd.f32 %v373, %v377
      %381 = vrot.lane.b32.xlu0 %v249, 96
      %v382 = vpop.permute.xlu0 %381
      %385 = vrot.lane.b32.xlu0 %v379, 96
      %v386 = vpop.permute.xlu0 %385
    $region70: #{tpu_custom_call.1} parent=1 // loop_footer
      %s107 = sadd.s32 1, %s103
    $region71: #{tpu_custom_call.1} parent=1 // loop_footer_branch
      %102 = sbr.rel target = $region67
    $region72: #{tpu_custom_call.1} parent=1 // loop_exit
      _
    %vm388 = vcmask 261120
    %389 = vst.msk [vmem:[#allocation2] sm:$0xff] %vm388, %v108
    %390 = vst.msk [vmem:[%s100] sm:$0xff] %vm388, %v109
    // Predicated region
    $region73: #{tpu_custom_call.1} parent=1 // pred_check
      %p391 = pneg %p90
    $region74: #{tpu_custom_call.1} parent=1 // pred_check_branch
      %393 = sbr.rel (%p391) target = $region76
    $region75: #{tpu_custom_call.1} parent=1 // pred_region
      %v394 = vpack.c.bf16 %v109, %v109
      %v395 = vld [vmem:[%s10] sm:$0xf]
      %v396 = vld [vmem:[%s10 + $0x4] sm:$0xf]
      %v397 = vld [vmem:[%s10 + $0x8] sm:$0xf]
      %v398 = vld [vmem:[%s10 + $0xc] sm:$0xf]
      %v399 = vld [vmem:[%s11] sm:$0x1]
      %v401 = vperm.slane %v399, 0
      %v407 = vunpack.c.l.b16 %v395
      %v408 = vunpack.c.l.b16 %v396
      %v409 = vunpack.c.l.b16 %v397
      %v410 = vunpack.c.l.b16 %v398
      %v411 = vpack.c.b16 %v408, %v407
      %v412 = vpack.c.b16 %v410, %v409
      %v416 = vsel %vm388, %v394, 0
      %418 = vmatpush.bf16.msra.mxu0 0
      %419 = vmatpush.bf16.msra.mxu0 0
      %420 = vmatpush.bf16.msra.mxu0 0
      %421 = vmatpush.bf16.msra.mxu0 0
      %422 = vmatpush.bf16.msra.mxu0 0
      %423 = vmatpush.bf16.msra.mxu0 0
      %424 = vmatpush.bf16.msra.mxu0 %v412
      %425 = vmatpush.bf16.msra.mxu0 %v411
      %426 = vmatmul.bf16.gmra.mxu0 %v416
      %v427 = vpop.f32.mrf.mxu0
      %v428 = vadd.f32 %v401, %v427
      %v429 = vpop.f32.mrf.mxu0
      %430 = vdwg.mxu0
      %vm431 = vcmask 64512
      %432 = vst.msk [vmem:[#allocation9] sm:$0xff] %vm431, %v428
    $region76: #{tpu_custom_call.1} parent=1 // pred_fallthru
      _
    // Predicated region
    $region77: #{tpu_custom_call.1} parent=1 // pred_check
      _
    $region78: #{tpu_custom_call.1} parent=1 // pred_check_branch
      %434 = sbr.rel (0) target = $region80
    $region79: #{tpu_custom_call.1} parent=1 // pred_region
      %436 = vsyncadd [#allocation5], 0
      %s438 = sshll.u32 [#allocation9], 4
      %s439 = int_to_ptr.vmem [resolvable:$true] %s438
      %s440 = sshll.u32 %s12, 4
      %s441 = int_to_ptr.hbm [resolvable:$true] %s440
      %443 = dma.vmem_to_hbm [thread:$0]  %s439, 128, %s441, [#allocation5]
    $region80: #{tpu_custom_call.1} parent=1 // pred_fallthru
      _
    // Predicated region
    $region81: #{tpu_custom_call.1} parent=1 // pred_check
      _
    $region82: #{tpu_custom_call.1} parent=1 // pred_check_branch
      %445 = sbr.rel (0) target = $region84
    $region83: #{tpu_custom_call.1} parent=1 // pred_region
      %447 = dma.done [#allocation5], 128
    $region84: #{tpu_custom_call.1} parent=1 // pred_fallthru
      _
    %448 = vsyncpa [#allocation4], 1
    %449 = vsyncpa [#allocation7], 1
    %450 = vsyncpa [#allocation5], 1

</llo_original>
